<compile_context>
chip_gen: v7x
topology: tpu7x:2x2x1
jax: 0.10.0
libtpu: 0.0.40
codegen_flags: <defaults>
</compile_context>

<pallas_src>
import functools

import jax
import jax.numpy as jnp
from jax.experimental import pallas as pl
from jax.experimental.pallas import tpu as pltpu


def _sinusoid_pe(length: int, features: int, dtype=jnp.float32) -> jnp.ndarray:
    """pe[pos, 0::2] = sin(pos * div), pe[pos, 1::2] = cos(pos * div)."""
    assert features % 2 == 0, "PEAdaptive2D requires an even channel count"
    position = jnp.arange(length, dtype=jnp.float32)[:, None]                    # [L, 1]
    div_term = jnp.exp(jnp.arange(0, features, 2, dtype=jnp.float32)
                       * (-jnp.log(10000.0) / features))                         # [C/2]
    pe = jnp.zeros((length, features), dtype=jnp.float32)
    pe = pe.at[:, 0::2].set(jnp.sin(position * div_term))
    pe = pe.at[:, 1::2].set(jnp.cos(position * div_term))
    return pe.astype(dtype)


def _tile_cap_bytes() -> int:
    """Generation-aware cap on one [C, TM] f32 tile.  128-MiB-VMEM chips (v5e/v6e)
    get 3 MiB, 64-MiB chips (v7x) get 2 MiB; total footprint (2x double-buffered
    in/out + pe maps + ~6 f32 intermediates) then stays well under 48 MiB."""
    try:
        vmem = pltpu.get_tpu_info().vmem_capacity_bytes
    except Exception:           # conservative fallback if the query is unavailable
        vmem = 64 << 20
    return (3 << 20) if vmem >= (96 << 20) else (2 << 20)


def _choose_block_pixels(P: int, C: int, itemsize: int, cap_bytes: int) -> int:
    """Pixels per grid step (TM) over the flattened H*W axis.  Either the whole
    image (block == full dim, always legal) or the largest multiple of 128 lanes
    whose [C, TM] tile fits under cap_bytes (lane-dense DMAs / stores)."""
    if C * P * itemsize <= cap_bytes:
        return P
    tm = (cap_bytes // (C * itemsize)) // 128 * 128
    return int(max(128, min(tm, P)))


def _pe_adaptive_2d_kernel(x_ref, w1t_ref, wa2t_ref, wb2t_ref, peh_ref, pew_ref,
                           o_ref):
    C = wa2t_ref.shape[0]
    mm_dt = w1t_ref.dtype

    # Channel-major pixel slab: [C, TM] (TM flattened pixels of one image).
    x_cm = x_ref[0].astype(mm_dt)

    # Fused first layer for both branches: one [2C, C] @ [C, TM] MXU matmul.
    h = jnp.maximum(
        jnp.dot(w1t_ref[...], x_cm, preferred_element_type=jnp.float32), 0.0)    # [2C, TM]
    h_mm = h.astype(wa2t_ref.dtype)

    # Second layers (per branch) + sigmoid (exp goes to the EUP slot).
    a_cm = jax.nn.sigmoid(
        jnp.dot(wa2t_ref[...], h_mm[:C], preferred_element_type=jnp.float32))    # [C, TM]
    b_cm = jax.nn.sigmoid(
        jnp.dot(wb2t_ref[...], h_mm[C:], preferred_element_type=jnp.float32))    # [C, TM]

    # Vectorized epilogue: two VPU FMAs + one lane-dense full-slab store.
    # peh_ref[c, p] = pe[h(p), c], pew_ref[c, p] = pe[w(p), c]  (precomputed per-pixel).
    o_ref[0] = (a_cm * peh_ref[...] + b_cm * pew_ref[...]).astype(o_ref.dtype)


def pe_adaptive_2d(x_nchw, wa1, wa2, wb1, wb2, max_len: int = 5000,
                   matmul_in_bf16: bool = False):
    """x_nchw: [B, C, H, W] -> [B, C, H, W]  (dropout = identity / eval mode)."""
    B, C, H, W = x_nchw.shape
    assert H <= max_len and W <= max_len
    dtype = x_nchw.dtype
    itemsize = jnp.dtype(dtype).itemsize
    P = H * W

    TM = _choose_block_pixels(P, C, itemsize, _tile_cap_bytes())
    n_mb = pl.cdiv(P, TM)           # partial tail block is legal (TM % 128 == 0)

    # Free (metadata-only) reshape — no HBM traffic, unlike an NCHW<->NHWC transpose.
    x3 = x_nchw.reshape(B, C, P)

    # Tiny weight prep: transpose to channel-major use and fuse layer 1 of both branches.
    mm_dtype = jnp.bfloat16 if matmul_in_bf16 else jnp.float32
    w1t = jnp.concatenate([wa1.T, wb1.T], axis=0).astype(mm_dtype)    # [2C, C]
    wa2t = wa2.T.astype(mm_dtype)                                     # [C, C]
    wb2t = wb2.T.astype(mm_dtype)                                     # [C, C]

    # Pre-expanded per-pixel pe maps (channel-major) -> no in-kernel broadcast /
    # reshape relayouts and no tiling constraints tied to H or W.
    pe_full = _sinusoid_pe(max(H, W), C, dtype=dtype)                 # [L, C]
    peh_map = jnp.repeat(pe_full[:H].T, W, axis=1)                    # [C, P]  pe[h, c]
    pew_map = jnp.tile(pe_full[:W].T, (1, H))                         # [C, P]  pe[w, c]

    # VMEM budget: double-buffered x/out + pe blocks, resident weights, f32 scratch.
    tile_io = C * TM * itemsize
    tile_f32 = C * TM * 4
    w_bytes = 4 * C * C * jnp.dtype(mm_dtype).itemsize
    vmem_est = (2 * 2 * tile_io          # x + out, double-buffered
                + 2 * 2 * tile_io        # pe_h + pe_w blocks, double-buffered
                + 2 * w_bytes            # resident weights (2 buffers allocated)
                + 6 * tile_f32)          # h_cat, a, b, fma result + slack
    vmem_limit = int(min(max(vmem_est + (4 << 20), 24 << 20), 48 << 20))  # v7x-safe

    cost = pl.CostEstimate(
        flops=8 * B * C * C * P,
        transcendentals=2 * B * C * P,
        bytes_accessed=(2 * B + 2) * C * P * itemsize
                       + 4 * C * C * jnp.dtype(mm_dtype).itemsize)

    # Grid: (pixel blocks, batch) with batch innermost — the pe-map block index only
    # changes when the pixel block changes, so Pallas skips their re-DMA across the
    # inner batch loop (each pe block read from HBM exactly once).
    out3 = pl.pallas_call(
        _pe_adaptive_2d_kernel,
        out_shape=jax.ShapeDtypeStruct((B, C, P), dtype),
        grid_spec=pltpu.PrefetchScalarGridSpec(
            num_scalar_prefetch=0,
            grid=(n_mb, B),
            in_specs=[
                pl.BlockSpec((1, C, TM), lambda m, b: (b, 0, m)),     # x slab
                pl.BlockSpec((2 * C, C), lambda m, b: (0, 0)),        # fused W1^T (resident)
                pl.BlockSpec((C, C), lambda m, b: (0, 0)),            # Wa2^T (resident)
                pl.BlockSpec((C, C), lambda m, b: (0, 0)),            # Wb2^T (resident)
                pl.BlockSpec((C, TM), lambda m, b: (0, m)),           # pe_h per-pixel map
                pl.BlockSpec((C, TM), lambda m, b: (0, m)),           # pe_w per-pixel map
            ],
            out_specs=pl.BlockSpec((1, C, TM), lambda m, b: (b, 0, m)),
        ),
        compiler_params=pltpu.CompilerParams(
            dimension_semantics=("parallel", "parallel"),
            vmem_limit_bytes=vmem_limit),
        cost_estimate=cost,
    )(x3, w1t, wa2t, wb2t, peh_map, pew_map)

    # TODO(synk): dropout (p=0.1) is identity here (eval mode); training-mode dropout
    # could be added with pltpu.prng_seed + pltpu.stateful_bernoulli.
    return out3.reshape(B, C, H, W)   # free reshape back to NCHW


def _reference(x_nchw, wa1, wa2, wb1, wb2):
    B, C, H, W = x_nchw.shape
    x = jnp.transpose(x_nchw, (0, 2, 3, 1))                                       # [B, H, W, C]
    pe = _sinusoid_pe(max(H, W), C)
    a = jax.nn.sigmoid(jnp.maximum(x @ wa1, 0.0) @ wa2)
    b = jax.nn.sigmoid(jnp.maximum(x @ wb1, 0.0) @ wb2)
    out = a * pe[:H][None, :, None, :] + b * pe[:W][None, None, :, :]
    return jnp.transpose(out, (0, 3, 1, 2))


if __name__ == "__main__":
    # Small shapes consistent with the module: x is [B, C, H, W].
    B, C, H, W = 2, 32, 16, 16
    key = jax.random.PRNGKey(0)
    kx, k1, k2, k3, k4 = jax.random.split(key, 5)

    x = jax.random.normal(kx, (B, C, H, W), dtype=jnp.float32)

    # nn.Linear(C, C, bias=False) default init: U(-1/sqrt(C), 1/sqrt(C)).
    bound = 1.0 / (C ** 0.5)
    wa1 = jax.random.uniform(k1, (C, C), jnp.float32, -bound, bound)
    wa2 = jax.random.uniform(k2, (C, C), jnp.float32, -bound, bound)
    wb1 = jax.random.uniform(k3, (C, C), jnp.float32, -bound, bound)
    wb2 = jax.random.uniform(k4, (C, C), jnp.float32, -bound, bound)

    out = jax.block_until_ready(pe_adaptive_2d(x, wa1, wa2, wb1, wb2))
    ref = jax.block_until_ready(_reference(x, wa1, wa2, wb1, wb2))

    assert out.shape == (B, C, H, W)
    err = float(jnp.max(jnp.abs(out - ref)))
    assert jnp.allclose(out, ref, atol=2e-5, rtol=2e-5), err
    print("KERNEL_OK")
</pallas_src>

<mosaic_0001>
module attributes {stable_mosaic.version = 11 : i64} {
  func.func @_pe_adaptive_2d_kernel(%arg0: i32, %arg1: i32, %arg2: memref<1x32x256xf32, #tpu.memory_space<vmem>>, %arg3: memref<64x32xf32, #tpu.memory_space<vmem>>, %arg4: memref<32x32xf32, #tpu.memory_space<vmem>>, %arg5: memref<32x32xf32, #tpu.memory_space<vmem>>, %arg6: memref<32x256xf32, #tpu.memory_space<vmem>>, %arg7: memref<32x256xf32, #tpu.memory_space<vmem>>, %arg8: memref<1x32x256xf32, #tpu.memory_space<vmem>>) attributes {dimension_semantics = [#tpu.dimension_semantics<parallel>, #tpu.dimension_semantics<parallel>], iteration_bounds = array<i64: 1, 2>, scalar_prefetch = 0 : i64, scratch_operands = 0 : i64, tpu.core_type = #tpu.core_type<tc>, window_params = [{transform_indices = @transform_0, window_bounds = array<i64: 1, 32, 256>}, {pipeline_mode = #tpu.pipeline_mode<synchronous>, transform_indices = @transform_1, window_bounds = array<i64: 64, 32>}, {pipeline_mode = #tpu.pipeline_mode<synchronous>, transform_indices = @transform_2, window_bounds = array<i64: 32, 32>}, {pipeline_mode = #tpu.pipeline_mode<synchronous>, transform_indices = @transform_3, window_bounds = array<i64: 32, 32>}, {transform_indices = @transform_4, window_bounds = array<i64: 32, 256>}, {transform_indices = @transform_5, window_bounds = array<i64: 32, 256>}, {transform_indices = @transform_6, window_bounds = array<i64: 1, 32, 256>}]} {
    %c0 = arith.constant 0 : index
    %c0_0 = arith.constant 0 : index
    %c0_1 = arith.constant 0 : index
    %0 = vector.load %arg2[%c0, %c0_0, %c0_1] : memref<1x32x256xf32, #tpu.memory_space<vmem>>, vector<1x32x256xf32>
    %1 = vector.shape_cast %0 : vector<1x32x256xf32> to vector<32x256xf32>
    %c0_2 = arith.constant 0 : index
    %c0_3 = arith.constant 0 : index
    %2 = vector.load %arg3[%c0_2, %c0_3] : memref<64x32xf32, #tpu.memory_space<vmem>>, vector<64x32xf32>
    %cst = arith.constant dense<0.000000e+00> : vector<64x256xf32>
    %3 = tpu.matmul %2, %1, %cst {dimension_numbers = #tpu.dot_dimension_numbers<[1], [0], [0], [1], [0, 0, 1, 1], [], []>} : vector<64x32xf32>, vector<32x256xf32>, vector<64x256xf32> -> vector<64x256xf32>
    %cst_4 = arith.constant 0.000000e+00 : f32
    %4 = vector.broadcast %cst_4 : f32 to vector<64x256xf32>
    %5 = arith.maximumf %3, %4 : vector<64x256xf32>
    %c0_5 = arith.constant 0 : index
    %c0_6 = arith.constant 0 : index
    %6 = vector.load %arg4[%c0_5, %c0_6] : memref<32x32xf32, #tpu.memory_space<vmem>>, vector<32x32xf32>
    %7 = vector.extract_strided_slice %5 {offsets = [0, 0], sizes = [32, 256], strides = [1, 1]} : vector<64x256xf32> to vector<32x256xf32>
    %cst_7 = arith.constant dense<0.000000e+00> : vector<32x256xf32>
    %8 = tpu.matmul %6, %7, %cst_7 {dimension_numbers = #tpu.dot_dimension_numbers<[1], [0], [0], [1], [0, 0, 1, 1], [], []>} : vector<32x32xf32>, vector<32x256xf32>, vector<32x256xf32> -> vector<32x256xf32>
    %9 = arith.negf %8 : vector<32x256xf32>
    %10 = math.exp %9 : vector<32x256xf32>
    %cst_8 = arith.constant 1.000000e+00 : f32
    %11 = vector.broadcast %cst_8 : f32 to vector<32x256xf32>
    %12 = arith.addf %11, %10 : vector<32x256xf32>
    %13 = arith.divf %11, %12 : vector<32x256xf32>
    %c0_9 = arith.constant 0 : index
    %c0_10 = arith.constant 0 : index
    %14 = vector.load %arg5[%c0_9, %c0_10] : memref<32x32xf32, #tpu.memory_space<vmem>>, vector<32x32xf32>
    %15 = vector.extract_strided_slice %5 {offsets = [32, 0], sizes = [32, 256], strides = [1, 1]} : vector<64x256xf32> to vector<32x256xf32>
    %cst_11 = arith.constant dense<0.000000e+00> : vector<32x256xf32>
    %16 = tpu.matmul %14, %15, %cst_11 {dimension_numbers = #tpu.dot_dimension_numbers<[1], [0], [0], [1], [0, 0, 1, 1], [], []>} : vector<32x32xf32>, vector<32x256xf32>, vector<32x256xf32> -> vector<32x256xf32>
    %17 = arith.negf %16 : vector<32x256xf32>
    %18 = math.exp %17 : vector<32x256xf32>
    %cst_12 = arith.constant 1.000000e+00 : f32
    %19 = vector.broadcast %cst_12 : f32 to vector<32x256xf32>
    %20 = arith.addf %19, %18 : vector<32x256xf32>
    %21 = arith.divf %19, %20 : vector<32x256xf32>
    %c0_13 = arith.constant 0 : index
    %c0_14 = arith.constant 0 : index
    %22 = vector.load %arg6[%c0_13, %c0_14] : memref<32x256xf32, #tpu.memory_space<vmem>>, vector<32x256xf32>
    %23 = arith.mulf %13, %22 : vector<32x256xf32>
    %c0_15 = arith.constant 0 : index
    %c0_16 = arith.constant 0 : index
    %24 = vector.load %arg7[%c0_15, %c0_16] : memref<32x256xf32, #tpu.memory_space<vmem>>, vector<32x256xf32>
    %25 = arith.mulf %21, %24 : vector<32x256xf32>
    %26 = arith.addf %23, %25 : vector<32x256xf32>
    %c0_17 = arith.constant 0 : index
    %c0_18 = arith.constant 0 : index
    %c0_19 = arith.constant 0 : index
    %27 = vector.load %arg8[%c0_17, %c0_18, %c0_19] : memref<1x32x256xf32, #tpu.memory_space<vmem>>, vector<1x32x256xf32>
    %28 = vector.shape_cast %27 : vector<1x32x256xf32> to vector<32x256xf32>
    %29 = vector.shape_cast %26 : vector<32x256xf32> to vector<1x32x256xf32>
    tpu.vector_store %arg8[%c0_17, %c0_18, %c0_19], %29 {strides = array<i32>} : memref<1x32x256xf32, #tpu.memory_space<vmem>>, vector<1x32x256xf32>,
    return
  }
  func.func @transform_0(%arg0: i32, %arg1: i32) -> (i32, i32, i32) {
    %c0_i32 = arith.constant 0 : i32
    %c0_i32_0 = arith.constant 0 : i32
    return %arg1, %c0_i32, %arg0 : i32, i32, i32
  }
  func.func @transform_1(%arg0: i32, %arg1: i32) -> (i32, i32) {
    %c0_i32 = arith.constant 0 : i32
    %c0_i32_0 = arith.constant 0 : i32
    %c0_i32_1 = arith.constant 0 : i32
    return %c0_i32, %c0_i32_0 : i32, i32
  }
  func.func @transform_2(%arg0: i32, %arg1: i32) -> (i32, i32) {
    %c0_i32 = arith.constant 0 : i32
    %c0_i32_0 = arith.constant 0 : i32
    %c0_i32_1 = arith.constant 0 : i32
    return %c0_i32, %c0_i32_0 : i32, i32
  }
  func.func @transform_3(%arg0: i32, %arg1: i32) -> (i32, i32) {
    %c0_i32 = arith.constant 0 : i32
    %c0_i32_0 = arith.constant 0 : i32
    %c0_i32_1 = arith.constant 0 : i32
    return %c0_i32, %c0_i32_0 : i32, i32
  }
  func.func @transform_4(%arg0: i32, %arg1: i32) -> (i32, i32) {
    %c0_i32 = arith.constant 0 : i32
    %c0_i32_0 = arith.constant 0 : i32
    return %c0_i32, %arg0 : i32, i32
  }
  func.func @transform_5(%arg0: i32, %arg1: i32) -> (i32, i32) {
    %c0_i32 = arith.constant 0 : i32
    %c0_i32_0 = arith.constant 0 : i32
    return %c0_i32, %arg0 : i32, i32
  }
  func.func @transform_6(%arg0: i32, %arg1: i32) -> (i32, i32, i32) {
    %c0_i32 = arith.constant 0 : i32
    %c0_i32_0 = arith.constant 0 : i32
    return %arg1, %c0_i32, %arg0 : i32, i32, i32
  }
}

</mosaic_0001>

<llo_original>
// kernel: tpu_custom_call.1
$region0: #{tpu_custom_call.1}
  #allocation0 [shape = 'u32[]', space=smem, size = 0x4, offset = 0x4, fixed_abs, tag = 'smem constant byte address 0x4 - core index']
  #allocation1 [shape = 'u32[144,128]{1,0:T(1,128)}', space=vmem, size = 0x12000, scoped, tag = 'internal scratch']
  %s0 = inlined_call_operand.hbm [shape: f32[2,32,256], index: 0, kind: input, shape index: {}]
  %s1 = inlined_call_operand.vmem [shape: f32[64,32], index: 1, kind: input, shape index: {}]
  %s2 = inlined_call_operand.vmem [shape: f32[32,32], index: 2, kind: input, shape index: {}]
  %s3 = inlined_call_operand.hbm [shape: f32[32,32], index: 3, kind: input, shape index: {}]
  %s4 = inlined_call_operand.vmem [shape: f32[32,256], index: 4, kind: input, shape index: {}]
  %s5 = inlined_call_operand.hbm [shape: f32[32,256], index: 5, kind: input, shape index: {}]
  %s6 = inlined_call_operand.hbm [shape: f32[2,32,256], index: 6, kind: output, shape index: {}]
  %s7 = sld [smem:[#allocation0]]
  $region69: #{tpu_custom_call.1} parent=0
    _
  %s9 = ssub.s32 1, %s7
  %s10 = scalar_select 0, %s9, %s7
  $region1: #{tpu_custom_call.1} parent=0
    #allocation2 [shape = 'u8[65536]{0}', space=vmem, size = 0x10000, scoped, tag = 'input window, operand 0']
    #allocation3 [shape = 's32[2]{0}', space=sflag, size = 0x8, scoped, tag = 'scoped memory for tpu_custom_call.1']
    #allocation4 [shape = 's32[2]{0}', space=sflag, size = 0x8, scoped, tag = 'scoped memory for tpu_custom_call.1']
    #allocation5 [shape = 'u8[16384]{0}', space=vmem, size = 0x4000, scoped, tag = 'input window, operand 3, single buffered']
    #allocation6 [shape = 's32[1]{0}', space=sflag, size = 0x4, scoped, tag = 'scoped memory for tpu_custom_call.1']
    #allocation7 [shape = 'u8[32768]{0}', space=vmem, size = 0x8000, scoped, tag = 'input window, operand 5, single buffered']
    #allocation8 [shape = 'u8[65536]{0}', space=vmem, size = 0x10000, scoped, tag = 'output window, operand 0']
    %11 = vsyncpa [#allocation3], 0
    %s12 = scalar_lea.sflag [#allocation3], 1
    %13 = vsyncpa %s12, 0
    %14 = vsyncpa [#allocation6], 0
    %15 = vsyncpa [#allocation4], 0
    %s16 = scalar_lea.sflag [#allocation4], 1
    %17 = vsyncpa %s16, 0
    loop: start=0, step=1, limit=4
    $region2: #{tpu_custom_call.1} parent=1 // loop_pre_header
      _
    $region3: #{tpu_custom_call.1} parent=1 // loop_header
      %s19 = sphi 0, %s23
      %p20 = scmp.ge.s32.totalorder %s19, 4
      %s26 = sphi 0, %s38
      %s27 = sphi 0, %s34
      %s28 = sphi 0, %s26
      %s29 = sphi 0, %s27
      %s30 = sphi 0, %s28
      %s31 = sphi 0, %s29
      %s43 = sphi 0, %s45
      %s46 = sphi 0, %s43
      %s47 = sphi 0, %s46
      %s63 = sphi 0, %s47
      %s67 = sphi 0, %s67
      %s69 = sphi 0, %s67
      %s70 = sphi 0, %s69
      %s84 = sphi 0, %s70
      %s88 = sphi 0, %s88
      %s90 = sphi 0, %s88
      %s91 = sphi 0, %s90
      %s105 = sphi 0, %s91
      %s109 = sphi 0, %s109
      %s111 = sphi 0, %s109
      %s112 = sphi 0, %s111
      %s126 = sphi 0, %s112
      %s132 = sphi 0, %s134
      %s135 = sphi 0, %s132
      %s136 = sphi 0, %s135
      %s152 = sphi 0, %s136
      %s158 = sphi 0, %s160
      %s161 = sphi 0, %s158
      %s162 = sphi 0, %s161
      %s178 = sphi 0, %s162
      %s186 = sphi 0, %s188
      %s189 = sphi 0, %s186
      %s190 = sphi 0, %s189
      %s206 = sphi 0, %s190
    $region4: #{tpu_custom_call.1} parent=1 // loop_header_branch
      %22 = sbr.rel (%p20) target = $region8
    $region5: #{tpu_custom_call.1} parent=1 // loop_body
      %s24 = ssub.s32 %s19, 1
      %s25 = ssub.s32 %s19, 2
      %s32 = sadd.s32 1, %s27
      %p33 = scmp.ge.s32.totalorder %s32, 2
      %s34 = scalar_select %p33, 0, %s32
      %s35 = sadd.s32 1, %s26
      %s36 = scalar_select %p33, %s35, %s26
      %p37 = scmp.ge.s32.totalorder %s36, 1
      %s38 = scalar_select %p37, 0, %s36
      %s39 = ssub.s32 %s27, %s34
      %s40 = ssub.s32 %s26, %s38
      %s41 = sor.u32 %s39, %s40
      %p42 = scmp.eq.s32.totalorder %s41, 0
      %s44 = sadd.s32 %s43, 1
      %s45 = scalar_select %p42, %s43, %s44
      %p48 = pneg %p42
      %p49 = scmp.eq.s32.totalorder %s19, 1
      %p50 = por %p48, %p49
      %p51 = scmp.ne.s32.totalorder %s43, %s46
      %p52 = scmp.eq.s32.totalorder %s19, 0
      %p53 = por %p51, %p52
      %p54 = scmp.ne.s32.totalorder %s43, %s46
      %p55 = scmp.eq.s32.totalorder %s24, 1
      %p56 = por %p54, %p55
      %p57 = scmp.ne.s32.totalorder %s46, %s47
      %p58 = scmp.eq.s32.totalorder %s24, 0
      %p59 = por %p57, %p58
      %p60 = scmp.ne.s32.totalorder %s46, %s47
      %p61 = scmp.eq.s32.totalorder %s25, 1
      %p62 = por %p60, %p61
      %p64 = scmp.ne.s32.totalorder %s47, %s63
      %p65 = scmp.eq.s32.totalorder %s25, 0
      %p66 = por %p64, %p65
      %s68 = sadd.s32 %s67, 1
      %p71 = scmp.eq.s32.totalorder %s19, 1
      %p72 = scmp.ne.s32.totalorder %s67, %s69
      %p73 = scmp.eq.s32.totalorder %s19, 0
      %p74 = por %p72, %p73
      %p75 = scmp.ne.s32.totalorder %s67, %s69
      %p76 = scmp.eq.s32.totalorder %s24, 1
      %p77 = por %p75, %p76
      %p78 = scmp.ne.s32.totalorder %s69, %s70
      %p79 = scmp.eq.s32.totalorder %s24, 0
      %p80 = por %p78, %p79
      %p81 = scmp.ne.s32.totalorder %s69, %s70
      %p82 = scmp.eq.s32.totalorder %s25, 1
      %p83 = por %p81, %p82
      %p85 = scmp.ne.s32.totalorder %s70, %s84
      %p86 = scmp.eq.s32.totalorder %s25, 0
      %p87 = por %p85, %p86
      %s89 = sadd.s32 %s88, 1
      %p92 = scmp.eq.s32.totalorder %s19, 1
      %p93 = scmp.ne.s32.totalorder %s88, %s90
      %p94 = scmp.eq.s32.totalorder %s19, 0
      %p95 = por %p93, %p94
      %p96 = scmp.ne.s32.totalorder %s88, %s90
      %p97 = scmp.eq.s32.totalorder %s24, 1
      %p98 = por %p96, %p97
      %p99 = scmp.ne.s32.totalorder %s90, %s91
      %p100 = scmp.eq.s32.totalorder %s24, 0
      %p101 = por %p99, %p100
      %p102 = scmp.ne.s32.totalorder %s90, %s91
      %p103 = scmp.eq.s32.totalorder %s25, 1
      %p104 = por %p102, %p103
      %p106 = scmp.ne.s32.totalorder %s91, %s105
      %p107 = scmp.eq.s32.totalorder %s25, 0
      %p108 = por %p106, %p107
      %s110 = sadd.s32 %s109, 1
      %p113 = scmp.eq.s32.totalorder %s19, 1
      %p114 = scmp.ne.s32.totalorder %s109, %s111
      %p115 = scmp.eq.s32.totalorder %s19, 0
      %p116 = por %p114, %p115
      %p117 = scmp.ne.s32.totalorder %s109, %s111
      %p118 = scmp.eq.s32.totalorder %s24, 1
      %p119 = por %p117, %p118
      %p120 = scmp.ne.s32.totalorder %s111, %s112
      %p121 = scmp.eq.s32.totalorder %s24, 0
      %p122 = por %p120, %p121
      %p123 = scmp.ne.s32.totalorder %s111, %s112
      %p124 = scmp.eq.s32.totalorder %s25, 1
      %p125 = por %p123, %p124
      %p127 = scmp.ne.s32.totalorder %s112, %s126
      %p128 = scmp.eq.s32.totalorder %s25, 0
      %p129 = por %p127, %p128
      %s130 = ssub.s32 %s26, %s38
      %p131 = scmp.eq.s32.totalorder %s130, 0
      %s133 = sadd.s32 %s132, 1
      %s134 = scalar_select %p131, %s132, %s133
      %p137 = pneg %p131
      %p138 = scmp.eq.s32.totalorder %s19, 1
      %p139 = por %p137, %p138
      %p140 = scmp.ne.s32.totalorder %s132, %s135
      %p141 = scmp.eq.s32.totalorder %s19, 0
      %p142 = por %p140, %p141
      %p143 = scmp.ne.s32.totalorder %s132, %s135
      %p144 = scmp.eq.s32.totalorder %s24, 1
      %p145 = por %p143, %p144
      %p146 = scmp.ne.s32.totalorder %s135, %s136
      %p147 = scmp.eq.s32.totalorder %s24, 0
      %p148 = por %p146, %p147
      %p149 = scmp.ne.s32.totalorder %s135, %s136
      %p150 = scmp.eq.s32.totalorder %s25, 1
      %p151 = por %p149, %p150
      %p153 = scmp.ne.s32.totalorder %s136, %s152
      %p154 = scmp.eq.s32.totalorder %s25, 0
      %p155 = por %p153, %p154
      %s156 = ssub.s32 %s26, %s38
      %p157 = scmp.eq.s32.totalorder %s156, 0
      %s159 = sadd.s32 %s158, 1
      %s160 = scalar_select %p157, %s158, %s159
      %p163 = pneg %p157
      %p164 = scmp.eq.s32.totalorder %s19, 1
      %p165 = por %p163, %p164
      %p166 = scmp.ne.s32.totalorder %s158, %s161
      %p167 = scmp.eq.s32.totalorder %s19, 0
      %p168 = por %p166, %p167
      %p169 = scmp.ne.s32.totalorder %s158, %s161
      %p170 = scmp.eq.s32.totalorder %s24, 1
      %p171 = por %p169, %p170
      %p172 = scmp.ne.s32.totalorder %s161, %s162
      %p173 = scmp.eq.s32.totalorder %s24, 0
      %p174 = por %p172, %p173
      %p175 = scmp.ne.s32.totalorder %s161, %s162
      %p176 = scmp.eq.s32.totalorder %s25, 1
      %p177 = por %p175, %p176
      %p179 = scmp.ne.s32.totalorder %s162, %s178
      %p180 = scmp.eq.s32.totalorder %s25, 0
      %p181 = por %p179, %p180
      %s182 = ssub.s32 %s27, %s34
      %s183 = ssub.s32 %s26, %s38
      %s184 = sor.u32 %s182, %s183
      %p185 = scmp.eq.s32.totalorder %s184, 0
      %s187 = sadd.s32 %s186, 1
      %s188 = scalar_select %p185, %s186, %s187
      %p191 = pneg %p185
      %p192 = scmp.eq.s32.totalorder %s19, 1
      %p193 = por %p191, %p192
      %p194 = scmp.ne.s32.totalorder %s186, %s189
      %p195 = scmp.eq.s32.totalorder %s19, 0
      %p196 = por %p194, %p195
      %p197 = scmp.ne.s32.totalorder %s186, %s189
      %p198 = scmp.eq.s32.totalorder %s24, 1
      %p199 = por %p197, %p198
      %p200 = scmp.ne.s32.totalorder %s189, %s190
      %p201 = scmp.eq.s32.totalorder %s24, 0
      %p202 = por %p200, %p201
      %p203 = scmp.ne.s32.totalorder %s189, %s190
      %p204 = scmp.eq.s32.totalorder %s25, 1
      %p205 = por %p203, %p204
      %p207 = scmp.ne.s32.totalorder %s190, %s206
      %p208 = scmp.eq.s32.totalorder %s25, 0
      %p209 = por %p207, %p208
      %p210 = scmp.le.s32.totalorder 1, %s19
      %p211 = scmp.lt.s32.totalorder %s19, 3
      %p212 = pnand %p210, %p211
      %p213 = pneg %p212
      // Predicated region
      $region9: #{tpu_custom_call.1} parent=5 // pred_check
        _
      $region10: #{tpu_custom_call.1} parent=5 // pred_check_branch
        %215 = sbr.rel (%p212) target = $region12
      $region11: #{tpu_custom_call.1} parent=5 // pred_region
        %s216 = ssub.s32 %s19, 1
        // Predicated region
        $region13: #{tpu_custom_call.1} parent=11 // pred_check
          %p217 = pneg %p80
        $region14: #{tpu_custom_call.1} parent=11 // pred_check_branch
          %219 = sbr.rel (%p217) target = $region16
        $region15: #{tpu_custom_call.1} parent=11 // pred_region
          _
        $region16: #{tpu_custom_call.1} parent=11 // pred_fallthru
          _
        // Predicated region
        $region17: #{tpu_custom_call.1} parent=11 // pred_check
          %p220 = pneg %p101
        $region18: #{tpu_custom_call.1} parent=11 // pred_check_branch
          %222 = sbr.rel (%p220) target = $region20
        $region19: #{tpu_custom_call.1} parent=11 // pred_region
          _
        $region20: #{tpu_custom_call.1} parent=11 // pred_fallthru
          _
        // Predicated region
        $region21: #{tpu_custom_call.1} parent=11 // pred_check
          %p223 = pneg %p122
        $region22: #{tpu_custom_call.1} parent=11 // pred_check_branch
          %225 = sbr.rel (%p223) target = $region24
        $region23: #{tpu_custom_call.1} parent=11 // pred_region
          %s227 = ssub.s32 512, 512
          %228 = vsyncadd [#allocation6], %s227
          %s229 = sshll.u32 [#allocation5], 4
          %s230 = int_to_ptr.vmem [resolvable:$true] %s229
          %235 = dma.hbm_to_vmem [thread:$0]  %s3, 512, %s230, [#allocation6], 128, 128, 8
        $region24: #{tpu_custom_call.1} parent=11 // pred_fallthru
          _
        // Predicated region
        $region25: #{tpu_custom_call.1} parent=11 // pred_check
          %p236 = pneg %p148
        $region26: #{tpu_custom_call.1} parent=11 // pred_check_branch
          %238 = sbr.rel (%p236) target = $region28
        $region27: #{tpu_custom_call.1} parent=11 // pred_region
          %s239 = smul.u32 2, %s28
          %p240 = scmp.lt.s32.totalorder %s239, 1
          %s241 = scalar_select %p240, %s239, 1
          %s242 = smul.addr %s241, 8
          %s243 = scalar_lea.vmem %s4, %s242
          %s244 = smul.u32 2, %s28
        $region28: #{tpu_custom_call.1} parent=11 // pred_fallthru
          _
        // Predicated region
        $region29: #{tpu_custom_call.1} parent=11 // pred_check
          %p245 = pneg %p174
        $region30: #{tpu_custom_call.1} parent=11 // pred_check_branch
          %247 = sbr.rel (%p245) target = $region32
        $region31: #{tpu_custom_call.1} parent=11 // pred_region
          %s248 = smul.u32 2, %s28
          %s250 = ssub.s32 1024, 1024
          %251 = vsyncadd [#allocation6], %s250
          %s252 = smul.addr %s248, 128
          %s253 = scalar_lea.hbm %s5, %s252
          %s254 = sshll.u32 [#allocation7], 4
          %s255 = int_to_ptr.vmem [resolvable:$true] %s254
          %260 = dma.hbm_to_vmem [thread:$0]  %s253, 1024, %s255, [#allocation6], 256, 256, 16
        $region32: #{tpu_custom_call.1} parent=11 // pred_fallthru
          _
      $region12: #{tpu_custom_call.1} parent=5 // pred_fallthru
        _
      %p261 = scmp.lt.s32.totalorder %s19, 2
      // Predicated region
      $region33: #{tpu_custom_call.1} parent=5 // pred_check
        %p262 = pneg %p261
      $region34: #{tpu_custom_call.1} parent=5 // pred_check_branch
        %264 = sbr.rel (%p262) target = $region36
      $region35: #{tpu_custom_call.1} parent=5 // pred_region
        // Predicated region
        $region37: #{tpu_custom_call.1} parent=35 // pred_check
          %p265 = pneg %p53
        $region38: #{tpu_custom_call.1} parent=35 // pred_check_branch
          %267 = sbr.rel (%p265) target = $region40
        $region39: #{tpu_custom_call.1} parent=35 // pred_region
          %s268 = sand.u32 %s43, 1
          %s269 = scalar_lea.sflag [#allocation3], %s268
          %s270 = sand.u32 %s43, 1
          %s271 = smul.addr %s270, 64
          %s272 = scalar_lea.vmem [#allocation2], %s271
          %s273 = smul.u32 2, %s26
          %s275 = ssub.s32 1024, 1024
          %276 = vsyncadd %s269, %s275
          %s277 = smul.addr %s27, 8
          %s278 = sadd.s32 %s273, %s277
          %s279 = smul.addr %s278, 128
          %s280 = scalar_lea.hbm %s0, %s279
          %s281 = sshll.u32 %s272, 4
          %s282 = int_to_ptr.vmem [resolvable:$true] %s281
          %287 = dma.hbm_to_vmem [thread:$0]  %s280, 1024, %s282, %s269, 256, 256, 16
        $region40: #{tpu_custom_call.1} parent=35 // pred_fallthru
          _
      $region36: #{tpu_custom_call.1} parent=5 // pred_fallthru
        _
      %p288 = scmp.le.s32.totalorder 1, %s19
      %p289 = scmp.lt.s32.totalorder %s19, 3
      %p290 = pnand %p288, %p289
      %p291 = pneg %p290
      // Predicated region
      $region41: #{tpu_custom_call.1} parent=5 // pred_check
        _
      $region42: #{tpu_custom_call.1} parent=5 // pred_check_branch
        %293 = sbr.rel (%p290) target = $region44
      $region43: #{tpu_custom_call.1} parent=5 // pred_region
        %s294 = ssub.s32 %s19, 1
        %s295 = sand.u32 %s46, 1
        %s296 = scalar_lea.sflag [#allocation3], %s295
        %s297 = sand.u32 %s46, 1
        %s298 = smul.addr %s297, 64
        %s299 = scalar_lea.vmem [#allocation2], %s298
        // Predicated region
        $region45: #{tpu_custom_call.1} parent=43 // pred_check
          %p300 = pneg %p59
        $region46: #{tpu_custom_call.1} parent=43 // pred_check_branch
          %302 = sbr.rel (%p300) target = $region48
        $region47: #{tpu_custom_call.1} parent=43 // pred_region
          %303 = dma.done %s296, 1024
        $region48: #{tpu_custom_call.1} parent=43 // pred_fallthru
          _
        // Predicated region
        $region49: #{tpu_custom_call.1} parent=43 // pred_check
          %p304 = pneg %p122
        $region50: #{tpu_custom_call.1} parent=43 // pred_check_branch
          %306 = sbr.rel (%p304) target = $region52
        $region51: #{tpu_custom_call.1} parent=43 // pred_region
          %307 = dma.done [#allocation6], 512
        $region52: #{tpu_custom_call.1} parent=43 // pred_fallthru
          _
        // Predicated region
        $region53: #{tpu_custom_call.1} parent=43 // pred_check
          %p308 = pneg %p174
        $region54: #{tpu_custom_call.1} parent=43 // pred_check_branch
          %310 = sbr.rel (%p308) target = $region56
        $region55: #{tpu_custom_call.1} parent=43 // pred_region
          %311 = dma.done [#allocation6], 1024
        $region56: #{tpu_custom_call.1} parent=43 // pred_fallthru
          _
        %s312 = sand.u32 %s46, 1
        %s313 = scalar_lea.sflag [#allocation3], %s312
        %s314 = sand.u32 %s46, 1
        %s315 = smul.addr %s314, 64
        %s316 = scalar_lea.vmem [#allocation2], %s315
        %p317 = pneg %p59
        %p318 = pneg %p56
        %p319 = pneg %p80
        %p320 = pneg %p77
        %p321 = pneg %p101
        %p322 = pneg %p98
        %p323 = pneg %p122
        %p324 = pneg %p119
        %s325 = smul.u32 2, %s28
        %p326 = scmp.lt.s32.totalorder %s325, 1
        %s327 = scalar_select %p326, %s325, 1
        %s328 = smul.addr %s327, 8
        %s329 = scalar_lea.vmem %s4, %s328
        %p330 = pneg %p148
        %p331 = pneg %p145
        %p332 = pneg %p174
        %p333 = pneg %p171
        %p334 = pneg %p202
        %p335 = pneg %p199
        %s336 = sand.u32 %s189, 1
        %s337 = scalar_lea.sflag [#allocation4], %s336
        %s338 = sand.u32 %s189, 1
        %s339 = smul.addr %s338, 64
        %s340 = scalar_lea.vmem [#allocation8], %s339
        %s341 = smul.u32 2, %s28
        %s342 = smul.u32 2, %s28
        %p343 = scmp.lt.s32.totalorder %s342, 1
        %s344 = scalar_select %p343, %s342, 1
        %s345 = smul.addr %s344, 8
        %s346 = scalar_lea.vmem %s4, %s345
        %s347 = smul.u32 2, %s28
        %s348 = smul.u32 2, %s28
        %s349 = smul.u32 2, %s28
        %v350 = vld [vmem:[%s299] sm:$0xff]
        %v351 = vld [vmem:[%s299 + $0x8] sm:$0xff]
        %v352 = vld [vmem:[%s299 + $0x10] sm:$0xff]
        %v353 = vld [vmem:[%s299 + $0x18] sm:$0xff]
        %v354 = vld [vmem:[%s299 + $0x20] sm:$0xff]
        %v355 = vld [vmem:[%s299 + $0x28] sm:$0xff]
        %v356 = vld [vmem:[%s299 + $0x30] sm:$0xff]
        %v357 = vld [vmem:[%s299 + $0x38] sm:$0xff]
        %v358 = vld [vmem:[%s1] sm:$0xff]
        %v359 = vld [vmem:[%s1 + $0x8] sm:$0xff]
        %v360 = vld [vmem:[%s1 + $0x10] sm:$0xff]
        %v361 = vld [vmem:[%s1 + $0x18] sm:$0xff]
        %v362 = vld [vmem:[%s1 + $0x20] sm:$0xff]
        %v363 = vld [vmem:[%s1 + $0x28] sm:$0xff]
        %v364 = vld [vmem:[%s1 + $0x30] sm:$0xff]
        %v365 = vld [vmem:[%s1 + $0x38] sm:$0xff]
        %vm366 = vcmask 261120
        %v368 = vsel %vm366, %v358, 0
        %v371 = vsel %vm366, %v359, 0
        %v374 = vsel %vm366, %v360, 0
        %v377 = vsel %vm366, %v361, 0
        %v380 = vsel %vm366, %v362, 0
        %v383 = vsel %vm366, %v363, 0
        %v386 = vsel %vm366, %v364, 0
        %v389 = vsel %vm366, %v365, 0
        %391 = vmatprep.subr.mxu0 %v351
        %392 = vmatpush1.msra.mxu0 %v350
        %393 = vmatprep.subr.mxu0 %v353
        %394 = vmatpush1.msra.mxu0 %v352
        %395 = vmatprep.subr.mxu0 %v355
        %396 = vmatpush1.msra.mxu0 %v354
        %397 = vmatprep.subr.mxu0 %v357
        %398 = vmatpush1.msra.mxu0 %v356
        %399 = vmatprep.subr.mxu0 0.0
        %400 = vmatpush1.msra.mxu0 0.0
        %401 = vmatprep.subr.mxu0 0.0
        %402 = vmatpush1.msra.mxu0 0.0
        %403 = vmatprep.subr.mxu0 0.0
        %404 = vmatpush1.msra.mxu0 0.0
        %405 = vmatprep.subr.mxu0 0.0
        %406 = vmatpush1.msra.mxu0 0.0
        %407 = vmatprep.subr.mxu0 0.0
        %408 = vmatpush1.msra.mxu0 0.0
        %409 = vmatprep.subr.mxu0 0.0
        %410 = vmatpush1.msra.mxu0 0.0
        %411 = vmatprep.subr.mxu0 0.0
        %412 = vmatpush1.msra.mxu0 0.0
        %413 = vmatprep.subr.mxu0 0.0
        %414 = vmatpush1.msra.mxu0 0.0
        %415 = vmatprep.subr.mxu0 0.0
        %416 = vmatpush1.msra.mxu0 0.0
        %417 = vmatprep.subr.mxu0 0.0
        %418 = vmatpush1.msra.mxu0 0.0
        %419 = vmatprep.subr.mxu0 0.0
        %420 = vmatpush1.msra.mxu0 0.0
        %421 = vmatprep.subr.mxu0 0.0
        %422 = vmatpush1.msra.mxu0 0.0
        %423 = vmatprep.subr.mxu0 0.0
        %424 = vmatpush1.msra.mxu0 0.0
        %425 = vmatprep.subr.mxu0 0.0
        %426 = vmatpush1.msra.mxu0 0.0
        %427 = vmatprep.subr.mxu0 0.0
        %428 = vmatpush1.msra.mxu0 0.0
        %429 = vmatprep.subr.mxu0 0.0
        %430 = vmatpush1.msra.mxu0 0.0
        %431 = vmatprep.subr.mxu0 0.0
        %432 = vmatpush1.msra.mxu0 0.0
        %433 = vmatprep.subr.mxu0 0.0
        %434 = vmatpush1.msra.mxu0 0.0
        %435 = vmatprep.subr.mxu0 0.0
        %436 = vmatpush1.msra.mxu0 0.0
        %437 = vmatprep.subr.mxu0 0.0
        %438 = vmatpush1.msra.mxu0 0.0
        %439 = vmatprep.subr.mxu0 0.0
        %440 = vmatpush1.msra.mxu0 0.0
        %441 = vmatprep.subr.mxu0 0.0
        %442 = vmatpush1.msra.mxu0 0.0
        %443 = vmatprep.subr.mxu0 0.0
        %444 = vmatpush1.msra.mxu0 0.0
        %445 = vmatprep.subr.mxu0 0.0
        %446 = vmatpush1.msra.mxu0 0.0
        %447 = vmatprep.subr.mxu0 0.0
        %448 = vmatpush1.msra.mxu0 0.0
        %449 = vmatprep.subr.mxu0 0.0
        %450 = vmatpush1.msra.mxu0 0.0
        %451 = vmatprep.subr.mxu0 0.0
        %452 = vmatpush1.msra.mxu0 0.0
        %453 = vmatprep.subr.mxu0 0.0
        %454 = vmatpush1.msra.mxu0 0.0
        %455 = vmatprep.mubr.f32.mxu0 0.0
        %456 = vmatmul.mubr.f32.gmra.mrb[0].mxu0 %v368
        %v457 = vpop.f32.mrb[0].mxu0
        %v458 = vadd.f32 0.0, %v457
        %v459 = vpop.f32.mrb[0].mxu0
        %v460 = vadd.f32 0.0, %v459
        %461 = vmatprep.mubr.f32.mxu0 0.0
        %462 = vmatmul.mubr.f32.gmra.mrb[0].mxu0 %v371
        %v463 = vpop.f32.mrb[0].mxu0
        %v464 = vadd.f32 0.0, %v463
        %v465 = vpop.f32.mrb[0].mxu0
        %v466 = vadd.f32 0.0, %v465
        %467 = vmatprep.mubr.f32.mxu0 0.0
        %468 = vmatmul.mubr.f32.gmra.mrb[0].mxu0 %v374
        %v469 = vpop.f32.mrb[0].mxu0
        %v470 = vadd.f32 0.0, %v469
        %v471 = vpop.f32.mrb[0].mxu0
        %v472 = vadd.f32 0.0, %v471
        %473 = vmatprep.mubr.f32.mxu0 0.0
        %474 = vmatmul.mubr.f32.gmra.mrb[0].mxu0 %v377
        %v475 = vpop.f32.mrb[0].mxu0
        %v476 = vadd.f32 0.0, %v475
        %v477 = vpop.f32.mrb[0].mxu0
        %v478 = vadd.f32 0.0, %v477
        %479 = vmatprep.mubr.f32.mxu0 0.0
        %480 = vmatmul.mubr.f32.gmra.mrb[0].mxu0 %v380
        %v481 = vpop.f32.mrb[0].mxu0
        %v482 = vadd.f32 0.0, %v481
        %v483 = vpop.f32.mrb[0].mxu0
        %v484 = vadd.f32 0.0, %v483
        %485 = vmatprep.mubr.f32.mxu0 0.0
        %486 = vmatmul.mubr.f32.gmra.mrb[0].mxu0 %v383
        %v487 = vpop.f32.mrb[0].mxu0
        %v488 = vadd.f32 0.0, %v487
        %v489 = vpop.f32.mrb[0].mxu0
        %v490 = vadd.f32 0.0, %v489
        %491 = vmatprep.mubr.f32.mxu0 0.0
        %492 = vmatmul.mubr.f32.gmra.mrb[0].mxu0 %v386
        %v493 = vpop.f32.mrb[0].mxu0
        %v494 = vadd.f32 0.0, %v493
        %v495 = vpop.f32.mrb[0].mxu0
        %v496 = vadd.f32 0.0, %v495
        %497 = vmatprep.mubr.f32.mxu0 0.0
        %498 = vmatmul.mubr.f32.gmra.mrb[0].mxu0 %v389
        %v499 = vpop.f32.mrb[0].mxu0
        %v500 = vadd.f32 0.0, %v499
        %v501 = vpop.f32.mrb[0].mxu0
        %v502 = vadd.f32 0.0, %v501
        %503 = vdwg.mxu0
        %v504 = vmax.f32 %v458, 0.0
        %v505 = vmax.f32 %v460, 0.0
        %v506 = vmax.f32 %v464, 0.0
        %v507 = vmax.f32 %v466, 0.0
        %v508 = vmax.f32 %v470, 0.0
        %v509 = vmax.f32 %v472, 0.0
        %v510 = vmax.f32 %v476, 0.0
        %v511 = vmax.f32 %v478, 0.0
        %v512 = vmax.f32 %v482, 0.0
        %v513 = vmax.f32 %v484, 0.0
        %v514 = vmax.f32 %v488, 0.0
        %v515 = vmax.f32 %v490, 0.0
        %v516 = vmax.f32 %v494, 0.0
        %v517 = vmax.f32 %v496, 0.0
        %v518 = vmax.f32 %v500, 0.0
        %v519 = vmax.f32 %v502, 0.0
        %v520 = vld [vmem:[%s2] sm:$0xff]
        %v521 = vld [vmem:[%s2 + $0x8] sm:$0xff]
        %v522 = vld [vmem:[%s2 + $0x10] sm:$0xff]
        %v523 = vld [vmem:[%s2 + $0x18] sm:$0xff]
        %v525 = vsel %vm366, %v520, 0
        %v528 = vsel %vm366, %v521, 0
        %v531 = vsel %vm366, %v522, 0
        %v534 = vsel %vm366, %v523, 0
        %536 = vmatprep.subr.mxu0 %v505
        %537 = vmatpush1.msra.mxu0 %v504
        %538 = vmatprep.subr.mxu0 %v507
        %539 = vmatpush1.msra.mxu0 %v506
        %540 = vmatprep.subr.mxu0 %v509
        %541 = vmatpush1.msra.mxu0 %v508
        %542 = vmatprep.subr.mxu0 %v511
        %543 = vmatpush1.msra.mxu0 %v510
        %544 = vmatprep.subr.mxu0 0.0
        %545 = vmatpush1.msra.mxu0 0.0
        %546 = vmatprep.subr.mxu0 0.0
        %547 = vmatpush1.msra.mxu0 0.0
        %548 = vmatprep.subr.mxu0 0.0
        %549 = vmatpush1.msra.mxu0 0.0
        %550 = vmatprep.subr.mxu0 0.0
        %551 = vmatpush1.msra.mxu0 0.0
        %552 = vmatprep.subr.mxu0 0.0
        %553 = vmatpush1.msra.mxu0 0.0
        %554 = vmatprep.subr.mxu0 0.0
        %555 = vmatpush1.msra.mxu0 0.0
        %556 = vmatprep.subr.mxu0 0.0
        %557 = vmatpush1.msra.mxu0 0.0
        %558 = vmatprep.subr.mxu0 0.0
        %559 = vmatpush1.msra.mxu0 0.0
        %560 = vmatprep.subr.mxu0 0.0
        %561 = vmatpush1.msra.mxu0 0.0
        %562 = vmatprep.subr.mxu0 0.0
        %563 = vmatpush1.msra.mxu0 0.0
        %564 = vmatprep.subr.mxu0 0.0
        %565 = vmatpush1.msra.mxu0 0.0
        %566 = vmatprep.subr.mxu0 0.0
        %567 = vmatpush1.msra.mxu0 0.0
        %568 = vmatprep.subr.mxu0 0.0
        %569 = vmatpush1.msra.mxu0 0.0
        %570 = vmatprep.subr.mxu0 0.0
        %571 = vmatpush1.msra.mxu0 0.0
        %572 = vmatprep.subr.mxu0 0.0
        %573 = vmatpush1.msra.mxu0 0.0
        %574 = vmatprep.subr.mxu0 0.0
        %575 = vmatpush1.msra.mxu0 0.0
        %576 = vmatprep.subr.mxu0 0.0
        %577 = vmatpush1.msra.mxu0 0.0
        %578 = vmatprep.subr.mxu0 0.0
        %579 = vmatpush1.msra.mxu0 0.0
        %580 = vmatprep.subr.mxu0 0.0
        %581 = vmatpush1.msra.mxu0 0.0
        %582 = vmatprep.subr.mxu0 0.0
        %583 = vmatpush1.msra.mxu0 0.0
        %584 = vmatprep.subr.mxu0 0.0
        %585 = vmatpush1.msra.mxu0 0.0
        %586 = vmatprep.subr.mxu0 0.0
        %587 = vmatpush1.msra.mxu0 0.0
        %588 = vmatprep.subr.mxu0 0.0
        %589 = vmatpush1.msra.mxu0 0.0
        %590 = vmatprep.subr.mxu0 0.0
        %591 = vmatpush1.msra.mxu0 0.0
        %592 = vmatprep.subr.mxu0 0.0
        %593 = vmatpush1.msra.mxu0 0.0
        %594 = vmatprep.subr.mxu0 0.0
        %595 = vmatpush1.msra.mxu0 0.0
        %596 = vmatprep.subr.mxu0 0.0
        %597 = vmatpush1.msra.mxu0 0.0
        %598 = vmatprep.subr.mxu0 0.0
        %599 = vmatpush1.msra.mxu0 0.0
        %600 = vmatprep.mubr.f32.mxu0 0.0
        %601 = vmatmul.mubr.f32.gmra.mrb[0].mxu0 %v525
        %v602 = vpop.f32.mrb[0].mxu0
        %v603 = vadd.f32 0.0, %v602
        %v604 = vpop.f32.mrb[0].mxu0
        %v605 = vadd.f32 0.0, %v604
        %606 = vmatprep.mubr.f32.mxu0 0.0
        %607 = vmatmul.mubr.f32.gmra.mrb[0].mxu0 %v528
        %v608 = vpop.f32.mrb[0].mxu0
        %v609 = vadd.f32 0.0, %v608
        %v610 = vpop.f32.mrb[0].mxu0
        %v611 = vadd.f32 0.0, %v610
        %612 = vmatprep.mubr.f32.mxu0 0.0
        %613 = vmatmul.mubr.f32.gmra.mrb[0].mxu0 %v531
        %v614 = vpop.f32.mrb[0].mxu0
        %v615 = vadd.f32 0.0, %v614
        %v616 = vpop.f32.mrb[0].mxu0
        %v617 = vadd.f32 0.0, %v616
        %618 = vmatprep.mubr.f32.mxu0 0.0
        %619 = vmatmul.mubr.f32.gmra.mrb[0].mxu0 %v534
        %v620 = vpop.f32.mrb[0].mxu0
        %v621 = vadd.f32 0.0, %v620
        %v622 = vpop.f32.mrb[0].mxu0
        %v623 = vadd.f32 0.0, %v622
        %624 = vdwg.mxu0
        %v625 = vxor.u32 %v603, 2147483648
        %v626 = vxor.u32 %v605, 2147483648
        %v627 = vxor.u32 %v609, 2147483648
        %v628 = vxor.u32 %v611, 2147483648
        %v629 = vxor.u32 %v615, 2147483648
        %v630 = vxor.u32 %v617, 2147483648
        %v631 = vxor.u32 %v621, 2147483648
        %v632 = vxor.u32 %v623, 2147483648
        %v633 = vmul.f32 %v625, 1.442695
        %v634 = vpow.pop %v633
        %v635 = vmul.f32 %v626, 1.442695
        %v636 = vpow.pop %v635
        %v637 = vmul.f32 %v627, 1.442695
        %v638 = vpow.pop %v637
        %v639 = vmul.f32 %v628, 1.442695
        %v640 = vpow.pop %v639
        %v641 = vmul.f32 %v629, 1.442695
        %v642 = vpow.pop %v641
        %v643 = vmul.f32 %v630, 1.442695
        %v644 = vpow.pop %v643
        %v645 = vmul.f32 %v631, 1.442695
        %v646 = vpow.pop %v645
        %v647 = vmul.f32 %v632, 1.442695
        %v648 = vpow.pop %v647
        %v649 = vadd.f32 %v634, 1.0
        %v650 = vadd.f32 %v636, 1.0
        %v651 = vadd.f32 %v638, 1.0
        %v652 = vadd.f32 %v640, 1.0
        %v653 = vadd.f32 %v642, 1.0
        %v654 = vadd.f32 %v644, 1.0
        %v655 = vadd.f32 %v646, 1.0
        %v656 = vadd.f32 %v648, 1.0
        %v657 = vrcp.pop %v649
        %v658 = vmul.f32 1.0, %v657
        %v659 = vrcp.pop %v650
        %v660 = vmul.f32 1.0, %v659
        %v661 = vrcp.pop %v651
        %v662 = vmul.f32 1.0, %v661
        %v663 = vrcp.pop %v652
        %v664 = vmul.f32 1.0, %v663
        %v665 = vrcp.pop %v653
        %v666 = vmul.f32 1.0, %v665
        %v667 = vrcp.pop %v654
        %v668 = vmul.f32 1.0, %v667
        %v669 = vrcp.pop %v655
        %v670 = vmul.f32 1.0, %v669
        %v671 = vrcp.pop %v656
        %v672 = vmul.f32 1.0, %v671
        %v673 = vld [vmem:[#allocation5] sm:$0xff]
        %v674 = vld [vmem:[#allocation5 + $0x8] sm:$0xff]
        %v675 = vld [vmem:[#allocation5 + $0x10] sm:$0xff]
        %v676 = vld [vmem:[#allocation5 + $0x18] sm:$0xff]
        %v678 = vsel %vm366, %v673, 0
        %v681 = vsel %vm366, %v674, 0
        %v684 = vsel %vm366, %v675, 0
        %v687 = vsel %vm366, %v676, 0
        %689 = vmatprep.subr.mxu0 %v513
        %690 = vmatpush1.msra.mxu0 %v512
        %691 = vmatprep.subr.mxu0 %v515
        %692 = vmatpush1.msra.mxu0 %v514
        %693 = vmatprep.subr.mxu0 %v517
        %694 = vmatpush1.msra.mxu0 %v516
        %695 = vmatprep.subr.mxu0 %v519
        %696 = vmatpush1.msra.mxu0 %v518
        %697 = vmatprep.subr.mxu0 0.0
        %698 = vmatpush1.msra.mxu0 0.0
        %699 = vmatprep.subr.mxu0 0.0
        %700 = vmatpush1.msra.mxu0 0.0
        %701 = vmatprep.subr.mxu0 0.0
        %702 = vmatpush1.msra.mxu0 0.0
        %703 = vmatprep.subr.mxu0 0.0
        %704 = vmatpush1.msra.mxu0 0.0
        %705 = vmatprep.subr.mxu0 0.0
        %706 = vmatpush1.msra.mxu0 0.0
        %707 = vmatprep.subr.mxu0 0.0
        %708 = vmatpush1.msra.mxu0 0.0
        %709 = vmatprep.subr.mxu0 0.0
        %710 = vmatpush1.msra.mxu0 0.0
        %711 = vmatprep.subr.mxu0 0.0
        %712 = vmatpush1.msra.mxu0 0.0
        %713 = vmatprep.subr.mxu0 0.0
        %714 = vmatpush1.msra.mxu0 0.0
        %715 = vmatprep.subr.mxu0 0.0
        %716 = vmatpush1.msra.mxu0 0.0
        %717 = vmatprep.subr.mxu0 0.0
        %718 = vmatpush1.msra.mxu0 0.0
        %719 = vmatprep.subr.mxu0 0.0
        %720 = vmatpush1.msra.mxu0 0.0
        %721 = vmatprep.subr.mxu0 0.0
        %722 = vmatpush1.msra.mxu0 0.0
        %723 = vmatprep.subr.mxu0 0.0
        %724 = vmatpush1.msra.mxu0 0.0
        %725 = vmatprep.subr.mxu0 0.0
        %726 = vmatpush1.msra.mxu0 0.0
        %727 = vmatprep.subr.mxu0 0.0
        %728 = vmatpush1.msra.mxu0 0.0
        %729 = vmatprep.subr.mxu0 0.0
        %730 = vmatpush1.msra.mxu0 0.0
        %731 = vmatprep.subr.mxu0 0.0
        %732 = vmatpush1.msra.mxu0 0.0
        %733 = vmatprep.subr.mxu0 0.0
        %734 = vmatpush1.msra.mxu0 0.0
        %735 = vmatprep.subr.mxu0 0.0
        %736 = vmatpush1.msra.mxu0 0.0
        %737 = vmatprep.subr.mxu0 0.0
        %738 = vmatpush1.msra.mxu0 0.0
        %739 = vmatprep.subr.mxu0 0.0
        %740 = vmatpush1.msra.mxu0 0.0
        %741 = vmatprep.subr.mxu0 0.0
        %742 = vmatpush1.msra.mxu0 0.0
        %743 = vmatprep.subr.mxu0 0.0
        %744 = vmatpush1.msra.mxu0 0.0
        %745 = vmatprep.subr.mxu0 0.0
        %746 = vmatpush1.msra.mxu0 0.0
        %747 = vmatprep.subr.mxu0 0.0
        %748 = vmatpush1.msra.mxu0 0.0
        %749 = vmatprep.subr.mxu0 0.0
        %750 = vmatpush1.msra.mxu0 0.0
        %751 = vmatprep.subr.mxu0 0.0
        %752 = vmatpush1.msra.mxu0 0.0
        %753 = vmatprep.mubr.f32.mxu0 0.0
        %754 = vmatmul.mubr.f32.gmra.mrb[0].mxu0 %v678
        %v755 = vpop.f32.mrb[0].mxu0
        %v756 = vadd.f32 0.0, %v755
        %v757 = vpop.f32.mrb[0].mxu0
        %v758 = vadd.f32 0.0, %v757
        %759 = vmatprep.mubr.f32.mxu0 0.0
        %760 = vmatmul.mubr.f32.gmra.mrb[0].mxu0 %v681
        %v761 = vpop.f32.mrb[0].mxu0
        %v762 = vadd.f32 0.0, %v761
        %v763 = vpop.f32.mrb[0].mxu0
        %v764 = vadd.f32 0.0, %v763
        %765 = vmatprep.mubr.f32.mxu0 0.0
        %766 = vmatmul.mubr.f32.gmra.mrb[0].mxu0 %v684
        %v767 = vpop.f32.mrb[0].mxu0
        %v768 = vadd.f32 0.0, %v767
        %v769 = vpop.f32.mrb[0].mxu0
        %v770 = vadd.f32 0.0, %v769
        %771 = vmatprep.mubr.f32.mxu0 0.0
        %772 = vmatmul.mubr.f32.gmra.mrb[0].mxu0 %v687
        %v773 = vpop.f32.mrb[0].mxu0
        %v774 = vadd.f32 0.0, %v773
        %v775 = vpop.f32.mrb[0].mxu0
        %v776 = vadd.f32 0.0, %v775
        %777 = vdwg.mxu0
        %v778 = vxor.u32 %v756, 2147483648
        %v779 = vxor.u32 %v758, 2147483648
        %v780 = vxor.u32 %v762, 2147483648
        %v781 = vxor.u32 %v764, 2147483648
        %v782 = vxor.u32 %v768, 2147483648
        %v783 = vxor.u32 %v770, 2147483648
        %v784 = vxor.u32 %v774, 2147483648
        %v785 = vxor.u32 %v776, 2147483648
        %v786 = vmul.f32 %v778, 1.442695
        %v787 = vpow.pop %v786
        %v788 = vmul.f32 %v779, 1.442695
        %v789 = vpow.pop %v788
        %v790 = vmul.f32 %v780, 1.442695
        %v791 = vpow.pop %v790
        %v792 = vmul.f32 %v781, 1.442695
        %v793 = vpow.pop %v792
        %v794 = vmul.f32 %v782, 1.442695
        %v795 = vpow.pop %v794
        %v796 = vmul.f32 %v783, 1.442695
        %v797 = vpow.pop %v796
        %v798 = vmul.f32 %v784, 1.442695
        %v799 = vpow.pop %v798
        %v800 = vmul.f32 %v785, 1.442695
        %v801 = vpow.pop %v800
        %v802 = vadd.f32 %v787, 1.0
        %v803 = vadd.f32 %v789, 1.0
        %v804 = vadd.f32 %v791, 1.0
        %v805 = vadd.f32 %v793, 1.0
        %v806 = vadd.f32 %v795, 1.0
        %v807 = vadd.f32 %v797, 1.0
        %v808 = vadd.f32 %v799, 1.0
        %v809 = vadd.f32 %v801, 1.0
        %v810 = vrcp.pop %v802
        %v811 = vmul.f32 1.0, %v810
        %v812 = vrcp.pop %v803
        %v813 = vmul.f32 1.0, %v812
        %v814 = vrcp.pop %v804
        %v815 = vmul.f32 1.0, %v814
        %v816 = vrcp.pop %v805
        %v817 = vmul.f32 1.0, %v816
        %v818 = vrcp.pop %v806
        %v819 = vmul.f32 1.0, %v818
        %v820 = vrcp.pop %v807
        %v821 = vmul.f32 1.0, %v820
        %v822 = vrcp.pop %v808
        %v823 = vmul.f32 1.0, %v822
        %v824 = vrcp.pop %v809
        %v825 = vmul.f32 1.0, %v824
        %v826 = vld [vmem:[%s346] sm:$0xff]
        %v827 = vld [vmem:[%s346 + $0x8] sm:$0xff]
        %v828 = vld [vmem:[%s346 + $0x10] sm:$0xff]
        %v829 = vld [vmem:[%s346 + $0x18] sm:$0xff]
        %v830 = vld [vmem:[%s346 + $0x20] sm:$0xff]
        %v831 = vld [vmem:[%s346 + $0x28] sm:$0xff]
        %v832 = vld [vmem:[%s346 + $0x30] sm:$0xff]
        %v833 = vld [vmem:[%s346 + $0x38] sm:$0xff]
        %v834 = vmul.f32 %v658, %v826
        %v835 = vmul.f32 %v660, %v827
        %v836 = vmul.f32 %v662, %v828
        %v837 = vmul.f32 %v664, %v829
        %v838 = vmul.f32 %v666, %v830
        %v839 = vmul.f32 %v668, %v831
        %v840 = vmul.f32 %v670, %v832
        %v841 = vmul.f32 %v672, %v833
        %v842 = vld [vmem:[#allocation7] sm:$0xff]
        %v843 = vld [vmem:[#allocation7 + $0x8] sm:$0xff]
        %v844 = vld [vmem:[#allocation7 + $0x10] sm:$0xff]
        %v845 = vld [vmem:[#allocation7 + $0x18] sm:$0xff]
        %v846 = vld [vmem:[#allocation7 + $0x20] sm:$0xff]
        %v847 = vld [vmem:[#allocation7 + $0x28] sm:$0xff]
        %v848 = vld [vmem:[#allocation7 + $0x30] sm:$0xff]
        %v849 = vld [vmem:[#allocation7 + $0x38] sm:$0xff]
        %v850 = vmul.f32 %v811, %v842
        %v851 = vmul.f32 %v813, %v843
        %v852 = vmul.f32 %v815, %v844
        %v853 = vmul.f32 %v817, %v845
        %v854 = vmul.f32 %v819, %v846
        %v855 = vmul.f32 %v821, %v847
        %v856 = vmul.f32 %v823, %v848
        %v857 = vmul.f32 %v825, %v849
        %v858 = vadd.f32 %v834, %v850
        %v859 = vadd.f32 %v835, %v851
        %v860 = vadd.f32 %v836, %v852
        %v861 = vadd.f32 %v837, %v853
        %v862 = vadd.f32 %v838, %v854
        %v863 = vadd.f32 %v839, %v855
        %v864 = vadd.f32 %v840, %v856
        %v865 = vadd.f32 %v841, %v857
        %866 = vst [vmem:[%s340] sm:$0xff] %v858
        %867 = vst [vmem:[%s340 + $0x8] sm:$0xff] %v859
        %868 = vst [vmem:[%s340 + $0x10] sm:$0xff] %v860
        %869 = vst [vmem:[%s340 + $0x18] sm:$0xff] %v861
        %870 = vst [vmem:[%s340 + $0x20] sm:$0xff] %v862
        %871 = vst [vmem:[%s340 + $0x28] sm:$0xff] %v863
        %872 = vst [vmem:[%s340 + $0x30] sm:$0xff] %v864
        %873 = vst [vmem:[%s340 + $0x38] sm:$0xff] %v865
        %s874 = sand.u32 %s189, 1
        %s875 = scalar_lea.sflag [#allocation4], %s874
        %s876 = sand.u32 %s189, 1
        %s877 = smul.addr %s876, 64
        %s878 = scalar_lea.vmem [#allocation8], %s877
        // Predicated region
        $region57: #{tpu_custom_call.1} parent=43 // pred_check
          %p879 = pneg %p199
        $region58: #{tpu_custom_call.1} parent=43 // pred_check_branch
          %881 = sbr.rel (%p879) target = $region60
        $region59: #{tpu_custom_call.1} parent=43 // pred_region
          %s882 = smul.u32 2, %s28
          %s884 = ssub.s32 1024, 1024
          %885 = vsyncadd %s875, %s884
          %s886 = smul.addr %s29, 8
          %s887 = sadd.s32 %s882, %s886
          %s888 = smul.addr %s887, 128
          %s889 = scalar_lea.hbm %s6, %s888
          %s890 = sshll.u32 %s878, 4
          %s891 = int_to_ptr.vmem [resolvable:$true] %s890
          %896 = dma.vmem_to_hbm [thread:$0]  %s891, 1024, %s889, %s875, 256, 256, 16
        $region60: #{tpu_custom_call.1} parent=43 // pred_fallthru
          _
      $region44: #{tpu_custom_call.1} parent=5 // pred_fallthru
        _
      %p897 = scmp.le.s32.totalorder 2, %s19
      // Predicated region
      $region61: #{tpu_custom_call.1} parent=5 // pred_check
        %p898 = pneg %p897
      $region62: #{tpu_custom_call.1} parent=5 // pred_check_branch
        %900 = sbr.rel (%p898) target = $region64
      $region63: #{tpu_custom_call.1} parent=5 // pred_region
        %s901 = ssub.s32 %s19, 2
        // Predicated region
        $region65: #{tpu_custom_call.1} parent=63 // pred_check
          %p902 = pneg %p205
        $region66: #{tpu_custom_call.1} parent=63 // pred_check_branch
          %904 = sbr.rel (%p902) target = $region68
        $region67: #{tpu_custom_call.1} parent=63 // pred_region
          %s905 = sand.u32 %s190, 1
          %s906 = scalar_lea.sflag [#allocation4], %s905
          %s907 = sand.u32 %s190, 1
          %s908 = smul.addr %s907, 64
          %s909 = scalar_lea.vmem [#allocation8], %s908
          %910 = dma.done %s906, 1024
        $region68: #{tpu_custom_call.1} parent=63 // pred_fallthru
          _
      $region64: #{tpu_custom_call.1} parent=5 // pred_fallthru
        _
    $region6: #{tpu_custom_call.1} parent=1 // loop_footer
      %s23 = sadd.s32 1, %s19
    $region7: #{tpu_custom_call.1} parent=1 // loop_footer_branch
      %18 = sbr.rel target = $region3
    $region8: #{tpu_custom_call.1} parent=1 // loop_exit
      _
    %911 = vsyncpa [#allocation3], 1
    %s912 = scalar_lea.sflag [#allocation3], 1
    %913 = vsyncpa %s912, 1
    %914 = vsyncpa [#allocation6], 1
    %915 = vsyncpa [#allocation4], 1
    %s916 = scalar_lea.sflag [#allocation4], 1
    %917 = vsyncpa %s916, 1

</llo_original>
